<compile_context>
chip_gen: v7x
topology: tpu7x:2x2x1
jax: 0.10.0
libtpu: 0.0.40
codegen_flags: <defaults>
</compile_context>

<pallas_src>
import functools

import jax
import jax.numpy as jnp
import numpy as np
from jax.experimental import pallas as pl
from jax.experimental.pallas import tpu as pltpu


def _round_up(x, m):
    return ((x + m - 1) // m) * m


def _expert_entropy_kernel(tgt_ref, gate_ref, expert_ref, part_ref, *, eps):
    tgt = tgt_ref[...]                                  # (TR, 1) int32
    gate = gate_ref[...].astype(jnp.float32)            # (TR, 1) f32
    expert = expert_ref[...]                            # (TR, C) native dtype
    tr, c = expert.shape

    # Gather expert_flat[r, targets_rep[r]] via one-hot multiply + lane reduce.
    # The select is exact in any dtype; only the gathered column is upcast.
    class_ids = jax.lax.broadcasted_iota(jnp.int32, (tr, c), 1)
    onehot = (class_ids == tgt).astype(expert.dtype)                       # (TR, C)
    expected = jnp.sum(expert * onehot, axis=-1, keepdims=True)            # (TR, 1)
    expected = expected.astype(jnp.float32)

    e_logp = jnp.log(expected + eps)                    # (TR, 1)
    absdiff = jnp.abs(gate - e_logp)                    # (TR, 1)

    # Per-tile scalar partial sum, written lane-dense (scalar in lane 0).
    s = jnp.sum(absdiff)
    lane = jax.lax.broadcasted_iota(jnp.int32, (1, 1, 128), 2)
    part_ref[...] = jnp.where(lane == 0, s, jnp.float32(0.0))


def expert_entropy_loss(expert_outputs, gate_outputs, targets):
    """expert_outputs: (B, E, C), gate_outputs: (B, E), targets: (B,) int.

    expert_outputs / gate_outputs may be f32 or bf16 (bf16 halves the
    dominant HBM stream for this memory-bound kernel).
    """
    B, E, C = expert_outputs.shape
    assert gate_outputs.shape == (B, E)
    assert targets.shape == (B,)

    rows = B * E
    itemsize = jnp.dtype(expert_outputs.dtype).itemsize

    # Per-generation VMEM budget for one (double-buffered) expert block.
    try:
        vmem_cap = int(pltpu.get_tpu_info().vmem_capacity_bytes)
    except Exception:
        vmem_cap = 64 * 2**20   # conservative fallback (v7x-sized)
    block_budget = max(1 * 2**20, min(8 * 2**20, vmem_cap // 16))

    row_bytes = C * itemsize
    tile_rows = max(8, (block_budget // row_bytes) // 8 * 8)
    tile_rows = min(tile_rows, _round_up(rows, 8))
    # If everything fits in one tile, still emit >= 2 grid steps so the
    # "parallel" grid axis can shard across both v7x TensorCores.
    if tile_rows >= rows and rows > 8:
        tile_rows = _round_up((rows + 1) // 2, 8)
    rows_pad = _round_up(rows, tile_rows)
    grid = rows_pad // tile_rows

    # Flatten to lane-dense 2-D layouts (reshape of contiguous data is free).
    expert_flat = expert_outputs.reshape(rows, C)
    gate_flat = gate_outputs.reshape(rows, 1)
    tgt_rep = jnp.repeat(targets.astype(jnp.int32), E).reshape(rows, 1)

    pad = rows_pad - rows
    if pad:
        # Padded rows: expert = 1.0, gate = 0, target = 0
        #   -> |0 - log(1.0 + eps)| == 0, so no in-kernel mask is needed.
        expert_flat = jnp.pad(expert_flat, ((0, pad), (0, 0)), constant_values=1.0)
        gate_flat = jnp.pad(gate_flat, ((0, pad), (0, 0)))
        tgt_rep = jnp.pad(tgt_rep, ((0, pad), (0, 0)))

    # Explicit VMEM limit so larger mem-bound tiles compile on every gen,
    # but never ask for more than half the physical capacity.
    expert_block_bytes = tile_rows * C * itemsize
    aux_block_bytes = tile_rows * 8           # gate + targets tiles (<= 4 B each)
    vmem_limit = int(min(max(vmem_cap // 2, 16 * 2**20),
                         max(16 * 2**20,
                             2 * (expert_block_bytes + aux_block_bytes) + 4 * 2**20)))

    kernel = functools.partial(_expert_entropy_kernel, eps=1e-15)
    partials = pl.pallas_call(
        kernel,
        out_shape=jax.ShapeDtypeStruct((grid, 1, 128), jnp.float32),
        grid=(grid,),
        in_specs=[
            pl.BlockSpec((tile_rows, 1), lambda i: (i, 0)),   # targets (repeated per expert)
            pl.BlockSpec((tile_rows, 1), lambda i: (i, 0)),   # gate_outputs (flattened)
            pl.BlockSpec((tile_rows, C), lambda i: (i, 0)),   # expert_outputs (flattened, lane-dense)
        ],
        out_specs=pl.BlockSpec((1, 1, 128), lambda i: (i, 0, 0)),
        compiler_params=pltpu.CompilerParams(
            dimension_semantics=("parallel",),
            vmem_limit_bytes=vmem_limit),
    )(tgt_rep, gate_flat, expert_flat)

    # Tiny final cross-tile reduction + 1/B (mean over batch) in the wrapper.
    return jnp.sum(partials) / B


def _reference(expert_outputs, gate_outputs, targets):
    eps = 1e-15
    expected = expert_outputs[jnp.arange(expert_outputs.shape[0]), :, targets]
    e_logp = jnp.log(expected + eps)
    return jnp.sum(jnp.mean(jnp.abs(gate_outputs - e_logp), axis=0))


if __name__ == "__main__":
    B, E, C = 16, 4, 10   # batch, num experts, num classes

    key = jax.random.PRNGKey(0)
    k1, k2, k3 = jax.random.split(key, 3)

    # Expert outputs are per-expert class probabilities (softmax over classes).
    expert_logits = jax.random.normal(k1, (B, E, C), dtype=jnp.float32)
    expert_outputs = jax.nn.softmax(expert_logits, axis=-1)
    gate_outputs = jax.random.normal(k2, (B, E), dtype=jnp.float32)
    targets = jax.random.randint(k3, (B,), 0, C, dtype=jnp.int32)

    out = expert_entropy_loss(expert_outputs, gate_outputs, targets)
    out = jax.block_until_ready(out)

    ref = _reference(expert_outputs, gate_outputs, targets)
    assert out.shape == ()
    assert np.allclose(np.asarray(out), np.asarray(ref), atol=1e-4, rtol=1e-5)

    print("KERNEL_OK")
</pallas_src>

<mosaic_0001>
module attributes {stable_mosaic.version = 11 : i64} {
  func.func @_expert_entropy_kernel(%arg0: i32, %arg1: memref<32x1xi32, #tpu.memory_space<vmem>>, %arg2: memref<32x1xf32, #tpu.memory_space<vmem>>, %arg3: memref<32x10xf32, #tpu.memory_space<vmem>>, %arg4: memref<1x1x128xf32, #tpu.memory_space<vmem>>) attributes {dimension_semantics = [#tpu.dimension_semantics<parallel>], iteration_bounds = array<i64: 2>, scalar_prefetch = 0 : i64, scratch_operands = 0 : i64, tpu.core_type = #tpu.core_type<tc>, window_params = [{transform_indices = @transform_0, window_bounds = array<i64: 32, 1>}, {transform_indices = @transform_1, window_bounds = array<i64: 32, 1>}, {transform_indices = @transform_2, window_bounds = array<i64: 32, 10>}, {transform_indices = @transform_3, window_bounds = array<i64: 1, 1, 128>}]} {
    %c0 = arith.constant 0 : index
    %c0_0 = arith.constant 0 : index
    %0 = vector.load %arg1[%c0, %c0_0] : memref<32x1xi32, #tpu.memory_space<vmem>>, vector<32x1xi32>
    %c0_1 = arith.constant 0 : index
    %c0_2 = arith.constant 0 : index
    %1 = vector.load %arg2[%c0_1, %c0_2] : memref<32x1xf32, #tpu.memory_space<vmem>>, vector<32x1xf32>
    %c0_3 = arith.constant 0 : index
    %c0_4 = arith.constant 0 : index
    %2 = vector.load %arg3[%c0_3, %c0_4] : memref<32x10xf32, #tpu.memory_space<vmem>>, vector<32x10xf32>
    %3 = tpu.iota {dimensions = array<i32: 1>} : vector<32x10xi32>
    %4 = vector.broadcast %0 : vector<32x1xi32> to vector<32x10xi32>
    %5 = arith.cmpi eq, %3, %4 : vector<32x10xi32>
    %6 = arith.extui %5 : vector<32x10xi1> to vector<32x10xi32>
    %7 = arith.sitofp %6 : vector<32x10xi32> to vector<32x10xf32>
    %8 = arith.mulf %2, %7 : vector<32x10xf32>
    %cst = arith.constant dense<0.000000e+00> : vector<32xf32>
    %9 = vector.multi_reduction <add>, %8, %cst [1] : vector<32x10xf32> to vector<32xf32>
    %10 = vector.shape_cast %9 : vector<32xf32> to vector<32x1xf32>
    %cst_5 = arith.constant 1.000000e-15 : f32
    %11 = vector.broadcast %cst_5 : f32 to vector<32x1xf32>
    %12 = arith.addf %10, %11 : vector<32x1xf32>
    %13 = math.log %12 : vector<32x1xf32>
    %14 = arith.subf %1, %13 : vector<32x1xf32>
    %15 = math.absf %14 : vector<32x1xf32>
    %16 = vector.shape_cast %15 : vector<32x1xf32> to vector<1x32x1xf32>
    %cst_6 = arith.constant dense<0.000000e+00> : vector<1xf32>
    %17 = vector.multi_reduction <add>, %16, %cst_6 [1, 2] : vector<1x32x1xf32> to vector<1xf32>
    %18 = vector.shape_cast %17 : vector<1xf32> to vector<1x1x1xf32>
    %19 = vector.extract %18[0, 0, 0] : f32 from vector<1x1x1xf32>
    %20 = tpu.iota {dimensions = array<i32: 2>} : vector<1x1x128xi32>
    %c0_i32 = arith.constant 0 : i32
    %21 = vector.broadcast %c0_i32 : i32 to vector<1x1x128xi32>
    %22 = arith.cmpi eq, %20, %21 : vector<1x1x128xi32>
    %cst_7 = arith.constant 0.000000e+00 : f32
    %23 = vector.broadcast %19 : f32 to vector<1x1x128xf32>
    %24 = vector.broadcast %cst_7 : f32 to vector<1x1x128xf32>
    %25 = arith.select %22, %23, %24 : vector<1x1x128xi1>, vector<1x1x128xf32>
    %c0_8 = arith.constant 0 : index
    %c0_9 = arith.constant 0 : index
    %c0_10 = arith.constant 0 : index
    %26 = vector.load %arg4[%c0_8, %c0_9, %c0_10] : memref<1x1x128xf32, #tpu.memory_space<vmem>>, vector<1x1x128xf32>
    tpu.vector_store %arg4[%c0_8, %c0_9, %c0_10], %25 {strides = array<i32>} : memref<1x1x128xf32, #tpu.memory_space<vmem>>, vector<1x1x128xf32>,
    return
  }
  func.func @transform_0(%arg0: i32) -> (i32, i32) {
    %c0_i32 = arith.constant 0 : i32
    %c0_i32_0 = arith.constant 0 : i32
    return %arg0, %c0_i32 : i32, i32
  }
  func.func @transform_1(%arg0: i32) -> (i32, i32) {
    %c0_i32 = arith.constant 0 : i32
    %c0_i32_0 = arith.constant 0 : i32
    return %arg0, %c0_i32 : i32, i32
  }
  func.func @transform_2(%arg0: i32) -> (i32, i32) {
    %c0_i32 = arith.constant 0 : i32
    %c0_i32_0 = arith.constant 0 : i32
    return %arg0, %c0_i32 : i32, i32
  }
  func.func @transform_3(%arg0: i32) -> (i32, i32, i32) {
    %c0_i32 = arith.constant 0 : i32
    %c0_i32_0 = arith.constant 0 : i32
    %c0_i32_1 = arith.constant 0 : i32
    return %arg0, %c0_i32, %c0_i32_0 : i32, i32, i32
  }
}

</mosaic_0001>

<llo_original>
// kernel: tpu_custom_call.1
$region0: #{tpu_custom_call.1}
  #allocation0 [shape = 'u32[]', space=smem, size = 0x4, offset = 0x4, fixed_abs, tag = 'smem constant byte address 0x4 - core index']
  #allocation1 [shape = 'u32[144,128]{1,0:T(1,128)}', space=vmem, size = 0x12000, scoped, tag = 'internal scratch']
  %s0 = inlined_call_operand.vmem [shape: s32[64,1], index: 0, kind: input, shape index: {}]
  %s1 = inlined_call_operand.vmem [shape: f32[64,1], index: 1, kind: input, shape index: {}]
  %s2 = inlined_call_operand.vmem [shape: f32[64,10], index: 2, kind: input, shape index: {}]
  %s3 = inlined_call_operand.hbm [shape: f32[2,1,128], index: 3, kind: output, shape index: {}]
  %s4 = sld [smem:[#allocation0]]
  $region45: #{tpu_custom_call.1} parent=0
    _
  %s6 = ssub.s32 1, %s4
  %s7 = scalar_select 0, %s6, %s4
  $region1: #{tpu_custom_call.1} parent=0
    #allocation2 [shape = 'u8[1024]{0}', space=vmem, size = 0x400, scoped, tag = 'output window, operand 0']
    #allocation3 [shape = 's32[2]{0}', space=sflag, size = 0x8, scoped, tag = 'scoped memory for tpu_custom_call.1']
    %8 = vsyncpa [#allocation3], 0
    %s9 = scalar_lea.sflag [#allocation3], 1
    %10 = vsyncpa %s9, 0
    loop: start=0, step=1, limit=4
    $region2: #{tpu_custom_call.1} parent=1 // loop_pre_header
      _
    $region3: #{tpu_custom_call.1} parent=1 // loop_header
      %s12 = sphi 0, %s16
      %p13 = scmp.ge.s32.totalorder %s12, 4
      %s22 = sphi 0, %s24
      %s25 = sphi 0, %s22
      %s26 = sphi 0, %s25
      %s42 = sphi 0, %s26
      %s48 = sphi 0, %s50
      %s51 = sphi 0, %s48
      %s52 = sphi 0, %s51
      %s68 = sphi 0, %s52
      %s74 = sphi 0, %s76
      %s77 = sphi 0, %s74
      %s78 = sphi 0, %s77
      %s94 = sphi 0, %s78
      %s100 = sphi 0, %s102
      %s103 = sphi 0, %s100
      %s104 = sphi 0, %s103
      %s120 = sphi 0, %s104
    $region4: #{tpu_custom_call.1} parent=1 // loop_header_branch
      %15 = sbr.rel (%p13) target = $region8
    $region5: #{tpu_custom_call.1} parent=1 // loop_body
      %s17 = ssub.s32 %s12, 1
      %s18 = ssub.s32 %s12, 2
      %s19 = sadd.s32 %s12, 1
      %s20 = ssub.s32 %s12, %s19
      %p21 = scmp.eq.s32.totalorder %s20, 0
      %s23 = sadd.s32 %s22, 1
      %s24 = scalar_select %p21, %s22, %s23
      %p27 = pneg %p21
      %p28 = scmp.eq.s32.totalorder %s12, 1
      %p29 = por %p27, %p28
      %p30 = scmp.ne.s32.totalorder %s22, %s25
      %p31 = scmp.eq.s32.totalorder %s12, 0
      %p32 = por %p30, %p31
      %p33 = scmp.ne.s32.totalorder %s22, %s25
      %p34 = scmp.eq.s32.totalorder %s17, 1
      %p35 = por %p33, %p34
      %p36 = scmp.ne.s32.totalorder %s25, %s26
      %p37 = scmp.eq.s32.totalorder %s17, 0
      %p38 = por %p36, %p37
      %p39 = scmp.ne.s32.totalorder %s25, %s26
      %p40 = scmp.eq.s32.totalorder %s18, 1
      %p41 = por %p39, %p40
      %p43 = scmp.ne.s32.totalorder %s26, %s42
      %p44 = scmp.eq.s32.totalorder %s18, 0
      %p45 = por %p43, %p44
      %s46 = ssub.s32 %s12, %s19
      %p47 = scmp.eq.s32.totalorder %s46, 0
      %s49 = sadd.s32 %s48, 1
      %s50 = scalar_select %p47, %s48, %s49
      %p53 = pneg %p47
      %p54 = scmp.eq.s32.totalorder %s12, 1
      %p55 = por %p53, %p54
      %p56 = scmp.ne.s32.totalorder %s48, %s51
      %p57 = scmp.eq.s32.totalorder %s12, 0
      %p58 = por %p56, %p57
      %p59 = scmp.ne.s32.totalorder %s48, %s51
      %p60 = scmp.eq.s32.totalorder %s17, 1
      %p61 = por %p59, %p60
      %p62 = scmp.ne.s32.totalorder %s51, %s52
      %p63 = scmp.eq.s32.totalorder %s17, 0
      %p64 = por %p62, %p63
      %p65 = scmp.ne.s32.totalorder %s51, %s52
      %p66 = scmp.eq.s32.totalorder %s18, 1
      %p67 = por %p65, %p66
      %p69 = scmp.ne.s32.totalorder %s52, %s68
      %p70 = scmp.eq.s32.totalorder %s18, 0
      %p71 = por %p69, %p70
      %s72 = ssub.s32 %s12, %s19
      %p73 = scmp.eq.s32.totalorder %s72, 0
      %s75 = sadd.s32 %s74, 1
      %s76 = scalar_select %p73, %s74, %s75
      %p79 = pneg %p73
      %p80 = scmp.eq.s32.totalorder %s12, 1
      %p81 = por %p79, %p80
      %p82 = scmp.ne.s32.totalorder %s74, %s77
      %p83 = scmp.eq.s32.totalorder %s12, 0
      %p84 = por %p82, %p83
      %p85 = scmp.ne.s32.totalorder %s74, %s77
      %p86 = scmp.eq.s32.totalorder %s17, 1
      %p87 = por %p85, %p86
      %p88 = scmp.ne.s32.totalorder %s77, %s78
      %p89 = scmp.eq.s32.totalorder %s17, 0
      %p90 = por %p88, %p89
      %p91 = scmp.ne.s32.totalorder %s77, %s78
      %p92 = scmp.eq.s32.totalorder %s18, 1
      %p93 = por %p91, %p92
      %p95 = scmp.ne.s32.totalorder %s78, %s94
      %p96 = scmp.eq.s32.totalorder %s18, 0
      %p97 = por %p95, %p96
      %s98 = ssub.s32 %s12, %s19
      %p99 = scmp.eq.s32.totalorder %s98, 0
      %s101 = sadd.s32 %s100, 1
      %s102 = scalar_select %p99, %s100, %s101
      %p105 = pneg %p99
      %p106 = scmp.eq.s32.totalorder %s12, 1
      %p107 = por %p105, %p106
      %p108 = scmp.ne.s32.totalorder %s100, %s103
      %p109 = scmp.eq.s32.totalorder %s12, 0
      %p110 = por %p108, %p109
      %p111 = scmp.ne.s32.totalorder %s100, %s103
      %p112 = scmp.eq.s32.totalorder %s17, 1
      %p113 = por %p111, %p112
      %p114 = scmp.ne.s32.totalorder %s103, %s104
      %p115 = scmp.eq.s32.totalorder %s17, 0
      %p116 = por %p114, %p115
      %p117 = scmp.ne.s32.totalorder %s103, %s104
      %p118 = scmp.eq.s32.totalorder %s18, 1
      %p119 = por %p117, %p118
      %p121 = scmp.ne.s32.totalorder %s104, %s120
      %p122 = scmp.eq.s32.totalorder %s18, 0
      %p123 = por %p121, %p122
      %p124 = scmp.le.s32.totalorder 1, %s12
      %p125 = scmp.lt.s32.totalorder %s12, 3
      %p126 = pnand %p124, %p125
      %p127 = pneg %p126
      // Predicated region
      $region9: #{tpu_custom_call.1} parent=5 // pred_check
        _
      $region10: #{tpu_custom_call.1} parent=5 // pred_check_branch
        %129 = sbr.rel (%p126) target = $region12
      $region11: #{tpu_custom_call.1} parent=5 // pred_region
        %s130 = ssub.s32 %s12, 1
      $region12: #{tpu_custom_call.1} parent=5 // pred_fallthru
        _
      %p131 = scmp.lt.s32.totalorder %s12, 2
      // Predicated region
      $region13: #{tpu_custom_call.1} parent=5 // pred_check
        %p132 = pneg %p131
      $region14: #{tpu_custom_call.1} parent=5 // pred_check_branch
        %134 = sbr.rel (%p132) target = $region16
      $region15: #{tpu_custom_call.1} parent=5 // pred_region
        // Predicated region
        $region17: #{tpu_custom_call.1} parent=15 // pred_check
          %p135 = pneg %p32
        $region18: #{tpu_custom_call.1} parent=15 // pred_check_branch
          %137 = sbr.rel (%p135) target = $region20
        $region19: #{tpu_custom_call.1} parent=15 // pred_region
          %s138 = smul.u32 4, %s12
          %p139 = scmp.lt.s32.totalorder %s138, 7
          %s140 = scalar_select %p139, %s138, 7
          %s141 = smul.addr %s140, 8
          %s142 = scalar_lea.vmem %s0, %s141
          %s143 = smul.u32 4, %s12
        $region20: #{tpu_custom_call.1} parent=15 // pred_fallthru
          _
        // Predicated region
        $region21: #{tpu_custom_call.1} parent=15 // pred_check
          %p144 = pneg %p58
        $region22: #{tpu_custom_call.1} parent=15 // pred_check_branch
          %146 = sbr.rel (%p144) target = $region24
        $region23: #{tpu_custom_call.1} parent=15 // pred_region
          %s147 = smul.u32 4, %s12
          %p148 = scmp.lt.s32.totalorder %s147, 7
          %s149 = scalar_select %p148, %s147, 7
          %s150 = smul.addr %s149, 8
          %s151 = scalar_lea.vmem %s1, %s150
          %s152 = smul.u32 4, %s12
        $region24: #{tpu_custom_call.1} parent=15 // pred_fallthru
          _
        // Predicated region
        $region25: #{tpu_custom_call.1} parent=15 // pred_check
          %p153 = pneg %p84
        $region26: #{tpu_custom_call.1} parent=15 // pred_check_branch
          %155 = sbr.rel (%p153) target = $region28
        $region27: #{tpu_custom_call.1} parent=15 // pred_region
          %s156 = smul.u32 4, %s12
          %p157 = scmp.lt.s32.totalorder %s156, 7
          %s158 = scalar_select %p157, %s156, 7
          %s159 = smul.addr %s158, 8
          %s160 = scalar_lea.vmem %s2, %s159
          %s161 = smul.u32 4, %s12
        $region28: #{tpu_custom_call.1} parent=15 // pred_fallthru
          _
      $region16: #{tpu_custom_call.1} parent=5 // pred_fallthru
        _
      %p162 = scmp.le.s32.totalorder 1, %s12
      %p163 = scmp.lt.s32.totalorder %s12, 3
      %p164 = pnand %p162, %p163
      %p165 = pneg %p164
      // Predicated region
      $region29: #{tpu_custom_call.1} parent=5 // pred_check
        _
      $region30: #{tpu_custom_call.1} parent=5 // pred_check_branch
        %167 = sbr.rel (%p164) target = $region32
      $region31: #{tpu_custom_call.1} parent=5 // pred_region
        %s168 = ssub.s32 %s12, 1
        %s169 = smul.u32 4, %s17
        %p170 = scmp.lt.s32.totalorder %s169, 7
        %s171 = scalar_select %p170, %s169, 7
        %s172 = smul.addr %s171, 8
        %s173 = scalar_lea.vmem %s0, %s172
        %p174 = pneg %p38
        %p175 = pneg %p35
        %s176 = smul.u32 4, %s17
        %p177 = scmp.lt.s32.totalorder %s176, 7
        %s178 = scalar_select %p177, %s176, 7
        %s179 = smul.addr %s178, 8
        %s180 = scalar_lea.vmem %s1, %s179
        %p181 = pneg %p64
        %p182 = pneg %p61
        %s183 = smul.u32 4, %s17
        %p184 = scmp.lt.s32.totalorder %s183, 7
        %s185 = scalar_select %p184, %s183, 7
        %s186 = smul.addr %s185, 8
        %s187 = scalar_lea.vmem %s2, %s186
        %p188 = pneg %p90
        %p189 = pneg %p87
        %p190 = pneg %p116
        %p191 = pneg %p113
        %s192 = sand.u32 %s103, 1
        %s193 = scalar_lea.sflag [#allocation3], %s192
        %s194 = sand.u32 %s103, 1
        %s195 = scalar_lea.vmem [#allocation2], %s194
        %s196 = smul.u32 4, %s17
        %p197 = scmp.lt.s32.totalorder %s196, 7
        %s198 = scalar_select %p197, %s196, 7
        %s199 = smul.addr %s198, 8
        %s200 = scalar_lea.vmem %s0, %s199
        %s201 = smul.u32 4, %s17
        %s202 = smul.u32 4, %s17
        %p203 = scmp.lt.s32.totalorder %s202, 7
        %s204 = scalar_select %p203, %s202, 7
        %s205 = smul.addr %s204, 8
        %s206 = scalar_lea.vmem %s1, %s205
        %s207 = smul.u32 4, %s17
        %s208 = smul.u32 4, %s17
        %p209 = scmp.lt.s32.totalorder %s208, 7
        %s210 = scalar_select %p209, %s208, 7
        %s211 = smul.addr %s210, 8
        %s212 = scalar_lea.vmem %s2, %s211
        %s213 = smul.u32 4, %s17
        %v214 = vld [vmem:[%s200] sm:$0xff]
        %v215 = vld [vmem:[%s200 + $0x8] sm:$0xff]
        %v216 = vld [vmem:[%s200 + $0x10] sm:$0xff]
        %v217 = vld [vmem:[%s200 + $0x18] sm:$0xff]
        %v218 = vld [vmem:[%s206] sm:$0xff]
        %v219 = vld [vmem:[%s206 + $0x8] sm:$0xff]
        %v220 = vld [vmem:[%s206 + $0x10] sm:$0xff]
        %v221 = vld [vmem:[%s206 + $0x18] sm:$0xff]
        %v222 = vld [vmem:[%s212] sm:$0xff]
        %v223 = vld [vmem:[%s212 + $0x8] sm:$0xff]
        %v224 = vld [vmem:[%s212 + $0x10] sm:$0xff]
        %v225 = vld [vmem:[%s212 + $0x18] sm:$0xff]
        %v226 = vlaneseq
        %v227 = vand.u32 %v226, 127
        %228 = vset.pattern.permute.xlu0 0
        %229 = vperm.xlu0 %228, %v214
        %v230 = vpop.permute.xlu0 %229
        %231 = vset.pattern.permute.xlu0 0
        %232 = vperm.xlu0 %231, %v215
        %v233 = vpop.permute.xlu0 %232
        %234 = vset.pattern.permute.xlu0 0
        %235 = vperm.xlu0 %234, %v216
        %v236 = vpop.permute.xlu0 %235
        %237 = vset.pattern.permute.xlu0 0
        %238 = vperm.xlu0 %237, %v217
        %v239 = vpop.permute.xlu0 %238
        %vm240 = vcmp.eq.s32.totalorder %v227, %v230
        %vm241 = vcmp.eq.s32.totalorder %v227, %v233
        %vm242 = vcmp.eq.s32.totalorder %v227, %v236
        %vm243 = vcmp.eq.s32.totalorder %v227, %v239
        %v244 = vsel %vm240, 1, 0
        %v245 = vsel %vm241, 1, 0
        %v246 = vsel %vm242, 1, 0
        %v247 = vsel %vm243, 1, 0
        %v248 = vcvt.s32.f32 %v244
        %v249 = vcvt.s32.f32 %v245
        %v250 = vcvt.s32.f32 %v246
        %v251 = vcvt.s32.f32 %v247
        %v252 = vmul.f32 %v222, %v248
        %v253 = vmul.f32 %v223, %v249
        %v254 = vmul.f32 %v224, %v250
        %v255 = vmul.f32 %v225, %v251
        %vm256 = vcmask 80896
        %v257 = vsel %vm256, %v252, 0.0
        %258 = vadd.xlane.f32.xlu0 %v257
        %v259 = vpop.xlane.xlu0 %258
        %v260 = vsel %vm256, %v253, 0.0
        %261 = vadd.xlane.f32.xlu0 %v260
        %v262 = vpop.xlane.xlu0 %261
        %v263 = vsel %vm256, %v254, 0.0
        %264 = vadd.xlane.f32.xlu0 %v263
        %v265 = vpop.xlane.xlu0 %264
        %v266 = vsel %vm256, %v255, 0.0
        %267 = vadd.xlane.f32.xlu0 %v266
        %v268 = vpop.xlane.xlu0 %267
        %v269 = vadd.f32 %v259, 1e-15
        %v270 = vadd.f32 %v262, 1e-15
        %v271 = vadd.f32 %v265, 1e-15
        %v272 = vadd.f32 %v268, 1e-15
        %v273 = vlog2.pop %v269
        %v274 = vmul.f32 %v273, 0.6931472
        %v275 = vlog2.pop %v270
        %v276 = vmul.f32 %v275, 0.6931472
        %v277 = vlog2.pop %v271
        %v278 = vmul.f32 %v277, 0.6931472
        %v279 = vlog2.pop %v272
        %v280 = vmul.f32 %v279, 0.6931472
        %v281 = vsub.f32 %v218, %v274
        %v282 = vsub.f32 %v219, %v276
        %v283 = vsub.f32 %v220, %v278
        %v284 = vsub.f32 %v221, %v280
        %v285 = vand.u32 2147483647, %v281
        %v286 = vand.u32 2147483647, %v282
        %v287 = vand.u32 2147483647, %v283
        %v288 = vand.u32 2147483647, %v284
        %vm289 = vcmask 7168
        %v290 = vsel %vm289, %v285, 0.0
        %v291 = vsel %vm289, %v286, 0.0
        %v292 = vadd.f32 %v290, %v291
        %v293 = vsel %vm289, %v287, 0.0
        %v294 = vadd.f32 %v292, %v293
        %v295 = vsel %vm289, %v288, 0.0
        %v296 = vadd.f32 %v294, %v295
        %297 = vadd.xlane.f32.xlu0 %v296
        %v298 = vpop.xlane.xlu0 %297
        %v299 = vrot.slane %v298, 4
        %v300 = vadd.f32 %v298, %v299
        %v301 = vrot.slane %v300, 2
        %v302 = vadd.f32 %v300, %v301
        %v303 = vrot.slane %v302, 1
        %v304 = vadd.f32 %v302, %v303
        %s305 = vtos %v304
        %vm306 = vcmp.eq.s32.totalorder %v227, 0
        %v307 = vstv %s305
        %v308 = vsel %vm306, %v307, 0.0
        %309 = vst [vmem:[%s195] sm:$0x1] %v308
        %s310 = sand.u32 %s103, 1
        %s311 = scalar_lea.sflag [#allocation3], %s310
        %s312 = sand.u32 %s103, 1
        %s313 = scalar_lea.vmem [#allocation2], %s312
        // Predicated region
        $region33: #{tpu_custom_call.1} parent=31 // pred_check
          %p314 = pneg %p113
        $region34: #{tpu_custom_call.1} parent=31 // pred_check_branch
          %316 = sbr.rel (%p314) target = $region36
        $region35: #{tpu_custom_call.1} parent=31 // pred_region
          %s318 = ssub.s32 16, 16
          %319 = vsyncadd %s311, %s318
          %s320 = smul.addr %s17, 16
          %s321 = scalar_lea.hbm %s3, %s320
          %s323 = sshll.u32 %s313, 4
          %s324 = int_to_ptr.vmem [resolvable:$true] %s323
          %326 = dma.vmem_to_hbm [thread:$0]  %s324, 16, %s321, %s311
        $region36: #{tpu_custom_call.1} parent=31 // pred_fallthru
          _
      $region32: #{tpu_custom_call.1} parent=5 // pred_fallthru
        _
      %p327 = scmp.le.s32.totalorder 2, %s12
      // Predicated region
      $region37: #{tpu_custom_call.1} parent=5 // pred_check
        %p328 = pneg %p327
      $region38: #{tpu_custom_call.1} parent=5 // pred_check_branch
        %330 = sbr.rel (%p328) target = $region40
      $region39: #{tpu_custom_call.1} parent=5 // pred_region
        %s331 = ssub.s32 %s12, 2
        // Predicated region
        $region41: #{tpu_custom_call.1} parent=39 // pred_check
          %p332 = pneg %p119
        $region42: #{tpu_custom_call.1} parent=39 // pred_check_branch
          %334 = sbr.rel (%p332) target = $region44
        $region43: #{tpu_custom_call.1} parent=39 // pred_region
          %s335 = sand.u32 %s104, 1
          %s336 = scalar_lea.sflag [#allocation3], %s335
          %s337 = sand.u32 %s104, 1
          %s338 = scalar_lea.vmem [#allocation2], %s337
          %339 = dma.done %s336, 16
        $region44: #{tpu_custom_call.1} parent=39 // pred_fallthru
          _
      $region40: #{tpu_custom_call.1} parent=5 // pred_fallthru
        _
    $region6: #{tpu_custom_call.1} parent=1 // loop_footer
      %s16 = sadd.s32 1, %s12
    $region7: #{tpu_custom_call.1} parent=1 // loop_footer_branch
      %11 = sbr.rel target = $region3
    $region8: #{tpu_custom_call.1} parent=1 // loop_exit
      _
    %340 = vsyncpa [#allocation3], 1
    %s341 = scalar_lea.sflag [#allocation3], 1
    %342 = vsyncpa %s341, 1

</llo_original>
